<compile_context>
chip_gen: v6e
topology: v6e:2x2x1
jax: 0.10.0
libtpu: 0.0.40
codegen_flags: <defaults>
</compile_context>

<pallas_src>
import functools

import jax
import jax.numpy as jnp
from jax.experimental import pallas as pl
from jax.experimental.pallas import tpu as pltpu

_LANE = 128
_BSUB = 16  # bf16 sublane packing: 16-row batch tiles keep the (2,TB,F)->(2*TB,F) reshape layout-preserving


def _round_up(x, m):
    return ((x + m - 1) // m) * m


def _pad_to(x, shape):
    return jnp.pad(x, [(0, s - d) for d, s in zip(x.shape, shape)])


# ----------------------------- Pallas kernel ---------------------------------
def _inverse_network_kernel(x_ref,                 # (2, TB, Fp) bf16: [obs ; next_obs]
                            w0_ref, b0_ref,        # (Fp, H0p) bf16, (1, H0p) f32
                            w1_ref, b1_ref,        # (H0p, H1p) bf16, (1, H1p) f32
                            wi1_ref, bi1_ref,      # (2*H1p, HIDp) bf16, (1, HIDp) f32
                            wi2_ref, bi2_ref,      # (HIDp, Ap) bf16, (1, Ap) f32
                            logits_ref, probs_ref,
                            *, action_shape):
    bf16 = jnp.bfloat16
    _, tb, fp = x_ref.shape

    # Fused FCEncoder: the stacked [obs; next_obs] tile is pushed through w0/w1 once
    # (single M=2*TB matmul per layer instead of two). Reshape is layout-preserving
    # because TB % 16 == 0.
    x = x_ref[...].reshape(2 * tb, fp)                                    # (2*TB, Fp) bf16
    h = jnp.dot(x, w0_ref[...], preferred_element_type=jnp.float32) + b0_ref[...]
    h = jnp.maximum(h, 0.0)
    emb = jnp.dot(h.astype(bf16), w1_ref[...],
                  preferred_element_type=jnp.float32) + b1_ref[...]
    emb = jnp.maximum(emb, 0.0)                                           # (2*TB, H1p) f32

    # cat([cur, next], -1) @ wi1 as a single K=2*H1p MXU pass (fills the 256-deep MXU
    # on v6e/v7x); wi1 has zero rows wherever the embeddings are lane-padded.
    emb_bf = emb.astype(bf16)
    cat = jnp.concatenate([emb_bf[:tb], emb_bf[tb:]], axis=-1)            # (TB, 2*H1p)
    h2 = jnp.dot(cat, wi1_ref[...], preferred_element_type=jnp.float32) + bi1_ref[...]
    h2 = jnp.maximum(h2, 0.0)                                             # (TB, HIDp) f32

    logits = jnp.dot(h2.astype(bf16), wi2_ref[...],
                     preferred_element_type=jnp.float32) + bi2_ref[...]   # (TB, Ap) f32
    logits_ref[...] = logits                                              # padded lanes hold 0

    # Softmax over the real action lanes. Padded logit lanes are exactly 0 (zero-padded
    # wi2/bi2), so max(logits) >= max(real logits) keeps exp stable; padded lanes are
    # then zeroed with a 0/1 mask multiply (no full-tile vcmp+vsel on -inf).
    lane = jax.lax.broadcasted_iota(jnp.int32, logits.shape, 1)
    mask = (lane < action_shape).astype(jnp.float32)
    m = jnp.max(logits, axis=-1, keepdims=True)
    e = jnp.exp(logits - m) * mask
    denom = jnp.sum(e, axis=-1, keepdims=True)
    inv = pl.reciprocal(denom, approx=True)        # EUP slot (otherwise idle here)
    inv = inv * (2.0 - denom * inv)                # one Newton step -> ~f32 accuracy
    probs_ref[...] = e * inv


# ------------------------------- wrapper --------------------------------------
def inverse_network_forward(obs, next_obs, params, *, block_b=512):
    """Non-inference forward pass: returns (pred_action_logits, pred_action_probs)."""
    B, obs_dim = obs.shape
    h0 = params["w0"].shape[1]
    h1 = params["w1"].shape[1]
    hid = params["wi1"].shape[1]          # 512
    A = params["wi2"].shape[1]

    # Lane-dense padded feature dims.
    Fp = _round_up(obs_dim, _LANE)
    H0p = _round_up(h0, _LANE)
    H1p = _round_up(h1, _LANE)
    HIDp = _round_up(hid, _LANE)
    Ap = _round_up(A, _LANE)

    # Batch tile: aim for >= 2 grid steps so the "parallel" grid axis can shard across
    # the two v7x TensorCores, while keeping tiles big enough to amortize per-step
    # overhead. block_b=512 stays well inside v7x's 64 MiB VMEM; on v5e/v6e larger
    # block_b (+ vmem_limit_bytes) can be swept.
    TB = max(_BSUB, min(block_b, _round_up(pl.cdiv(B, 2), _BSUB)))
    Bp = _round_up(B, TB)
    grid = (Bp // TB,)

    bf16 = jnp.bfloat16
    f32 = jnp.float32

    # Pre-stack obs/next_obs so the DMA delivers the fused-encoder layout (no in-kernel
    # sublane concatenate). Inputs travel as bf16 (halves input HBM traffic).
    x = jnp.stack([obs, next_obs], axis=0).astype(bf16)                   # (2, B, obs_dim)
    x = _pad_to(x, (2, Bp, Fp))

    w0 = _pad_to(params["w0"].astype(bf16), (Fp, H0p))
    b0 = _pad_to(params["b0"].astype(f32), (1, H0p))
    w1 = _pad_to(params["w1"].astype(bf16), (H0p, H1p))
    b1 = _pad_to(params["b1"].astype(f32), (1, H1p))

    # Unsplit inverse_net[0] weight laid out for the lane-concatenated [cur ; next]
    # embedding: real rows at [0:h1] and [H1p:H1p+h1], zeros elsewhere.
    wi1 = jnp.zeros((2 * H1p, HIDp), bf16)
    wi1 = wi1.at[:h1, :hid].set(params["wi1"][:h1].astype(bf16))
    wi1 = wi1.at[H1p:H1p + h1, :hid].set(params["wi1"][h1:].astype(bf16))
    bi1 = _pad_to(params["bi1"].astype(f32), (1, HIDp))
    wi2 = _pad_to(params["wi2"].astype(bf16), (HIDp, Ap))
    bi2 = _pad_to(params["bi2"].astype(f32), (1, Ap))

    def const_spec(shape):
        return pl.BlockSpec(shape, lambda i, _s=shape: (0,) * len(_s))

    in_specs = [
        pl.BlockSpec((2, TB, Fp), lambda i: (0, i, 0)),   # stacked activations (pipelined)
        const_spec((Fp, H0p)), const_spec((1, H0p)),      # weights/biases: VMEM-resident
        const_spec((H0p, H1p)), const_spec((1, H1p)),
        const_spec((2 * H1p, HIDp)), const_spec((1, HIDp)),
        const_spec((HIDp, Ap)), const_spec((1, Ap)),
    ]
    out_specs = (pl.BlockSpec((TB, Ap), lambda i: (i, 0)),
                 pl.BlockSpec((TB, Ap), lambda i: (i, 0)))

    # Advisory cost estimate with the padded shapes actually executed.
    flops = (2 * (2 * Bp) * Fp * H0p            # encoder layer 0 (fused both batches)
             + 2 * (2 * Bp) * H0p * H1p         # encoder layer 1
             + 2 * Bp * (2 * H1p) * HIDp        # inverse_net[0]
             + 2 * Bp * HIDp * Ap)              # inverse_net[2]
    transcendentals = Bp * Ap                   # exp (+ EUP reciprocal) in softmax
    weight_bytes = (2 * (Fp * H0p + H0p * H1p + 2 * H1p * HIDp + HIDp * Ap)
                    + 4 * (H0p + H1p + HIDp + Ap))
    io_bytes = 2 * (2 * Bp * Fp) + 4 * (2 * Bp * Ap)
    cost = pl.CostEstimate(flops=flops, transcendentals=transcendentals,
                           bytes_accessed=weight_bytes + io_bytes)

    kernel = functools.partial(_inverse_network_kernel, action_shape=A)

    logits_pad, probs_pad = pl.pallas_call(
        kernel,
        grid=grid,
        out_shape=(jax.ShapeDtypeStruct((Bp, Ap), jnp.float32),
                   jax.ShapeDtypeStruct((Bp, Ap), jnp.float32)),
        in_specs=in_specs,
        out_specs=out_specs,
        compiler_params=pltpu.CompilerParams(dimension_semantics=("parallel",)),
        cost_estimate=cost,
    )(x, w0, b0, w1, b1, wi1, bi1, wi2, bi2)

    return logits_pad[:B, :A], probs_pad[:B, :A]


# --------------------------- parameter construction --------------------------
def init_params(key, obs_shape, hidden_size_list, action_shape):
    """Deterministic PyTorch-nn.Linear-style init; weights stored as (in, out)."""
    def linear(key, fan_in, fan_out):
        kw, kb = jax.random.split(key)
        bound = 1.0 / jnp.sqrt(fan_in)
        w = jax.random.uniform(kw, (fan_in, fan_out), jnp.float32, -bound, bound)
        b = jax.random.uniform(kb, (1, fan_out), jnp.float32, -bound, bound)
        return w, b

    h0, h1 = hidden_size_list[0], hidden_size_list[-1]
    k0, k1, k2, k3 = jax.random.split(key, 4)
    w0, b0 = linear(k0, obs_shape, h0)
    w1, b1 = linear(k1, h0, h1)
    wi1, bi1 = linear(k2, 2 * h1, 512)
    wi2, bi2 = linear(k3, 512, action_shape)
    return dict(w0=w0, b0=b0, w1=w1, b1=b1, wi1=wi1, bi1=bi1, wi2=wi2, bi2=bi2)


# ------------------------------ pure-JAX reference ---------------------------
def _bf16_dot(x, w):
    # Matches the kernel's MXU math: bf16 operands, f32 accumulation.
    return jnp.dot(x.astype(jnp.bfloat16), w.astype(jnp.bfloat16),
                   preferred_element_type=jnp.float32)


def _reference(obs, next_obs, p):
    def embed(x):
        h = jnp.maximum(_bf16_dot(x, p["w0"]) + p["b0"], 0.0)
        return jnp.maximum(_bf16_dot(h, p["w1"]) + p["b1"], 0.0)
    cat = jnp.concatenate([embed(obs), embed(next_obs)], axis=-1)
    h2 = jnp.maximum(_bf16_dot(cat, p["wi1"]) + p["bi1"], 0.0)
    logits = _bf16_dot(h2, p["wi2"]) + p["bi2"]
    return logits, jax.nn.softmax(logits, axis=-1)


if __name__ == "__main__":
    key = jax.random.PRNGKey(0)
    k_param, k_obs, k_next = jax.random.split(key, 3)

    batch = 2
    obs_shape = 16
    hidden_size_list = [32, 32]
    action_shape = 8

    params = init_params(k_param, obs_shape, hidden_size_list, action_shape)
    obs = jax.random.normal(k_obs, (batch, obs_shape), jnp.float32)
    next_obs = jax.random.normal(k_next, (batch, obs_shape), jnp.float32)

    logits, probs = inverse_network_forward(obs, next_obs, params)
    jax.block_until_ready((logits, probs))

    ref_logits, ref_probs = _reference(obs, next_obs, params)
    assert logits.shape == (batch, action_shape) and probs.shape == (batch, action_shape)
    assert jnp.allclose(logits, ref_logits, atol=1e-4, rtol=1e-4)
    assert jnp.allclose(probs, ref_probs, atol=1e-5, rtol=1e-4)
    assert jnp.allclose(jnp.sum(probs, axis=-1), 1.0, atol=1e-5)

    print("KERNEL_OK")
</pallas_src>

<mosaic_0001>
module attributes {stable_mosaic.version = 11 : i64} {
  func.func @_inverse_network_kernel(%arg0: i32, %arg1: memref<2x16x128xbf16, #tpu.memory_space<vmem>>, %arg2: memref<128x128xbf16, #tpu.memory_space<vmem>>, %arg3: memref<1x128xf32, #tpu.memory_space<vmem>>, %arg4: memref<128x128xbf16, #tpu.memory_space<vmem>>, %arg5: memref<1x128xf32, #tpu.memory_space<vmem>>, %arg6: memref<256x512xbf16, #tpu.memory_space<vmem>>, %arg7: memref<1x512xf32, #tpu.memory_space<vmem>>, %arg8: memref<512x128xbf16, #tpu.memory_space<vmem>>, %arg9: memref<1x128xf32, #tpu.memory_space<vmem>>, %arg10: memref<16x128xf32, #tpu.memory_space<vmem>>, %arg11: memref<16x128xf32, #tpu.memory_space<vmem>>) attributes {dimension_semantics = [#tpu.dimension_semantics<parallel>], iteration_bounds = array<i64: 1>, scalar_prefetch = 0 : i64, scratch_operands = 0 : i64, tpu.core_type = #tpu.core_type<tc>, window_params = [{transform_indices = @transform_0, window_bounds = array<i64: 2, 16, 128>}, {pipeline_mode = #tpu.pipeline_mode<synchronous>, transform_indices = @transform_1, window_bounds = array<i64: 128, 128>}, {pipeline_mode = #tpu.pipeline_mode<synchronous>, transform_indices = @transform_2, window_bounds = array<i64: 1, 128>}, {pipeline_mode = #tpu.pipeline_mode<synchronous>, transform_indices = @transform_3, window_bounds = array<i64: 128, 128>}, {pipeline_mode = #tpu.pipeline_mode<synchronous>, transform_indices = @transform_4, window_bounds = array<i64: 1, 128>}, {pipeline_mode = #tpu.pipeline_mode<synchronous>, transform_indices = @transform_5, window_bounds = array<i64: 256, 512>}, {pipeline_mode = #tpu.pipeline_mode<synchronous>, transform_indices = @transform_6, window_bounds = array<i64: 1, 512>}, {pipeline_mode = #tpu.pipeline_mode<synchronous>, transform_indices = @transform_7, window_bounds = array<i64: 512, 128>}, {pipeline_mode = #tpu.pipeline_mode<synchronous>, transform_indices = @transform_8, window_bounds = array<i64: 1, 128>}, {transform_indices = @transform_9, window_bounds = array<i64: 16, 128>}, {transform_indices = @transform_10, window_bounds = array<i64: 16, 128>}]} {
    %c0 = arith.constant 0 : index
    %c0_0 = arith.constant 0 : index
    %c0_1 = arith.constant 0 : index
    %0 = vector.load %arg1[%c0, %c0_0, %c0_1] : memref<2x16x128xbf16, #tpu.memory_space<vmem>>, vector<2x16x128xbf16>
    %1 = vector.shape_cast %0 : vector<2x16x128xbf16> to vector<32x128xbf16>
    %c0_2 = arith.constant 0 : index
    %c0_3 = arith.constant 0 : index
    %2 = vector.load %arg2[%c0_2, %c0_3] : memref<128x128xbf16, #tpu.memory_space<vmem>>, vector<128x128xbf16>
    %cst = arith.constant dense<0.000000e+00> : vector<32x128xf32>
    %3 = tpu.matmul %1, %2, %cst {dimension_numbers = #tpu.dot_dimension_numbers<[1], [0], [0], [1], [0, 0, 1, 1], [], []>} : vector<32x128xbf16>, vector<128x128xbf16>, vector<32x128xf32> -> vector<32x128xf32>
    %c0_4 = arith.constant 0 : index
    %c0_5 = arith.constant 0 : index
    %4 = vector.load %arg3[%c0_4, %c0_5] : memref<1x128xf32, #tpu.memory_space<vmem>>, vector<1x128xf32>
    %5 = vector.broadcast %4 : vector<1x128xf32> to vector<32x128xf32>
    %6 = arith.addf %3, %5 : vector<32x128xf32>
    %cst_6 = arith.constant 0.000000e+00 : f32
    %7 = vector.broadcast %cst_6 : f32 to vector<32x128xf32>
    %8 = arith.maximumf %6, %7 : vector<32x128xf32>
    %9 = arith.truncf %8 : vector<32x128xf32> to vector<32x128xbf16>
    %c0_7 = arith.constant 0 : index
    %c0_8 = arith.constant 0 : index
    %10 = vector.load %arg4[%c0_7, %c0_8] : memref<128x128xbf16, #tpu.memory_space<vmem>>, vector<128x128xbf16>
    %cst_9 = arith.constant dense<0.000000e+00> : vector<32x128xf32>
    %11 = tpu.matmul %9, %10, %cst_9 {dimension_numbers = #tpu.dot_dimension_numbers<[1], [0], [0], [1], [0, 0, 1, 1], [], []>} : vector<32x128xbf16>, vector<128x128xbf16>, vector<32x128xf32> -> vector<32x128xf32>
    %c0_10 = arith.constant 0 : index
    %c0_11 = arith.constant 0 : index
    %12 = vector.load %arg5[%c0_10, %c0_11] : memref<1x128xf32, #tpu.memory_space<vmem>>, vector<1x128xf32>
    %13 = vector.broadcast %12 : vector<1x128xf32> to vector<32x128xf32>
    %14 = arith.addf %11, %13 : vector<32x128xf32>
    %cst_12 = arith.constant 0.000000e+00 : f32
    %15 = vector.broadcast %cst_12 : f32 to vector<32x128xf32>
    %16 = arith.maximumf %14, %15 : vector<32x128xf32>
    %17 = arith.truncf %16 : vector<32x128xf32> to vector<32x128xbf16>
    %18 = vector.extract_strided_slice %17 {offsets = [0, 0], sizes = [16, 128], strides = [1, 1]} : vector<32x128xbf16> to vector<16x128xbf16>
    %19 = vector.extract_strided_slice %17 {offsets = [16, 0], sizes = [16, 128], strides = [1, 1]} : vector<32x128xbf16> to vector<16x128xbf16>
    %20 = tpu.concatenate %18, %19 in 1 : vector<16x128xbf16>, vector<16x128xbf16> -> vector<16x256xbf16>
    %c0_13 = arith.constant 0 : index
    %c0_14 = arith.constant 0 : index
    %21 = vector.load %arg6[%c0_13, %c0_14] : memref<256x512xbf16, #tpu.memory_space<vmem>>, vector<256x512xbf16>
    %cst_15 = arith.constant dense<0.000000e+00> : vector<16x512xf32>
    %22 = tpu.matmul %20, %21, %cst_15 {dimension_numbers = #tpu.dot_dimension_numbers<[1], [0], [0], [1], [0, 0, 1, 1], [], []>} : vector<16x256xbf16>, vector<256x512xbf16>, vector<16x512xf32> -> vector<16x512xf32>
    %c0_16 = arith.constant 0 : index
    %c0_17 = arith.constant 0 : index
    %23 = vector.load %arg7[%c0_16, %c0_17] : memref<1x512xf32, #tpu.memory_space<vmem>>, vector<1x512xf32>
    %24 = vector.broadcast %23 : vector<1x512xf32> to vector<16x512xf32>
    %25 = arith.addf %22, %24 : vector<16x512xf32>
    %cst_18 = arith.constant 0.000000e+00 : f32
    %26 = vector.broadcast %cst_18 : f32 to vector<16x512xf32>
    %27 = arith.maximumf %25, %26 : vector<16x512xf32>
    %28 = arith.truncf %27 : vector<16x512xf32> to vector<16x512xbf16>
    %c0_19 = arith.constant 0 : index
    %c0_20 = arith.constant 0 : index
    %29 = vector.load %arg8[%c0_19, %c0_20] : memref<512x128xbf16, #tpu.memory_space<vmem>>, vector<512x128xbf16>
    %cst_21 = arith.constant dense<0.000000e+00> : vector<16x128xf32>
    %30 = tpu.matmul %28, %29, %cst_21 {dimension_numbers = #tpu.dot_dimension_numbers<[1], [0], [0], [1], [0, 0, 1, 1], [], []>} : vector<16x512xbf16>, vector<512x128xbf16>, vector<16x128xf32> -> vector<16x128xf32>
    %c0_22 = arith.constant 0 : index
    %c0_23 = arith.constant 0 : index
    %31 = vector.load %arg9[%c0_22, %c0_23] : memref<1x128xf32, #tpu.memory_space<vmem>>, vector<1x128xf32>
    %32 = vector.broadcast %31 : vector<1x128xf32> to vector<16x128xf32>
    %33 = arith.addf %30, %32 : vector<16x128xf32>
    %c0_24 = arith.constant 0 : index
    %c0_25 = arith.constant 0 : index
    %34 = vector.load %arg10[%c0_24, %c0_25] : memref<16x128xf32, #tpu.memory_space<vmem>>, vector<16x128xf32>
    tpu.vector_store %arg10[%c0_24, %c0_25], %33 {strides = array<i32>} : memref<16x128xf32, #tpu.memory_space<vmem>>, vector<16x128xf32>,
    %35 = tpu.iota {dimensions = array<i32: 1>} : vector<16x128xi32>
    %c8_i32 = arith.constant 8 : i32
    %36 = vector.broadcast %c8_i32 : i32 to vector<16x128xi32>
    %37 = arith.cmpi slt, %35, %36 : vector<16x128xi32>
    %38 = arith.extui %37 : vector<16x128xi1> to vector<16x128xi32>
    %39 = arith.sitofp %38 : vector<16x128xi32> to vector<16x128xf32>
    %cst_26 = arith.constant dense<0xFF800000> : vector<16xf32>
    %40 = vector.multi_reduction <maximumf>, %33, %cst_26 [1] : vector<16x128xf32> to vector<16xf32>
    %41 = vector.shape_cast %40 : vector<16xf32> to vector<16x1xf32>
    %42 = vector.broadcast %41 : vector<16x1xf32> to vector<16x128xf32>
    %43 = arith.subf %33, %42 : vector<16x128xf32>
    %44 = math.exp %43 : vector<16x128xf32>
    %45 = arith.mulf %44, %39 : vector<16x128xf32>
    %cst_27 = arith.constant dense<0.000000e+00> : vector<16xf32>
    %46 = vector.multi_reduction <add>, %45, %cst_27 [1] : vector<16x128xf32> to vector<16xf32>
    %47 = vector.shape_cast %46 : vector<16xf32> to vector<16x1xf32>
    %48 = tpu.reciprocal %47 {approx = true} : vector<16x1xf32> -> vector<16x1xf32>
    %49 = arith.mulf %47, %48 : vector<16x1xf32>
    %cst_28 = arith.constant 2.000000e+00 : f32
    %50 = vector.broadcast %cst_28 : f32 to vector<16x1xf32>
    %51 = arith.subf %50, %49 : vector<16x1xf32>
    %52 = arith.mulf %48, %51 : vector<16x1xf32>
    %53 = vector.broadcast %52 : vector<16x1xf32> to vector<16x128xf32>
    %54 = arith.mulf %45, %53 : vector<16x128xf32>
    %c0_29 = arith.constant 0 : index
    %c0_30 = arith.constant 0 : index
    %55 = vector.load %arg11[%c0_29, %c0_30] : memref<16x128xf32, #tpu.memory_space<vmem>>, vector<16x128xf32>
    tpu.vector_store %arg11[%c0_29, %c0_30], %54 {strides = array<i32>} : memref<16x128xf32, #tpu.memory_space<vmem>>, vector<16x128xf32>,
    return
  }
  func.func @transform_0(%arg0: i32) -> (i32, i32, i32) {
    %c0_i32 = arith.constant 0 : i32
    %c0_i32_0 = arith.constant 0 : i32
    %c0_i32_1 = arith.constant 0 : i32
    return %c0_i32, %arg0, %c0_i32_0 : i32, i32, i32
  }
  func.func @transform_1(%arg0: i32) -> (i32, i32) {
    %c0_i32 = arith.constant 0 : i32
    %c0_i32_0 = arith.constant 0 : i32
    %c0_i32_1 = arith.constant 0 : i32
    return %c0_i32, %c0_i32_0 : i32, i32
  }
  func.func @transform_2(%arg0: i32) -> (i32, i32) {
    %c0_i32 = arith.constant 0 : i32
    %c0_i32_0 = arith.constant 0 : i32
    %c0_i32_1 = arith.constant 0 : i32
    return %c0_i32, %c0_i32_0 : i32, i32
  }
  func.func @transform_3(%arg0: i32) -> (i32, i32) {
    %c0_i32 = arith.constant 0 : i32
    %c0_i32_0 = arith.constant 0 : i32
    %c0_i32_1 = arith.constant 0 : i32
    return %c0_i32, %c0_i32_0 : i32, i32
  }
  func.func @transform_4(%arg0: i32) -> (i32, i32) {
    %c0_i32 = arith.constant 0 : i32
    %c0_i32_0 = arith.constant 0 : i32
    %c0_i32_1 = arith.constant 0 : i32
    return %c0_i32, %c0_i32_0 : i32, i32
  }
  func.func @transform_5(%arg0: i32) -> (i32, i32) {
    %c0_i32 = arith.constant 0 : i32
    %c0_i32_0 = arith.constant 0 : i32
    %c0_i32_1 = arith.constant 0 : i32
    return %c0_i32, %c0_i32_0 : i32, i32
  }
  func.func @transform_6(%arg0: i32) -> (i32, i32) {
    %c0_i32 = arith.constant 0 : i32
    %c0_i32_0 = arith.constant 0 : i32
    %c0_i32_1 = arith.constant 0 : i32
    return %c0_i32, %c0_i32_0 : i32, i32
  }
  func.func @transform_7(%arg0: i32) -> (i32, i32) {
    %c0_i32 = arith.constant 0 : i32
    %c0_i32_0 = arith.constant 0 : i32
    %c0_i32_1 = arith.constant 0 : i32
    return %c0_i32, %c0_i32_0 : i32, i32
  }
  func.func @transform_8(%arg0: i32) -> (i32, i32) {
    %c0_i32 = arith.constant 0 : i32
    %c0_i32_0 = arith.constant 0 : i32
    %c0_i32_1 = arith.constant 0 : i32
    return %c0_i32, %c0_i32_0 : i32, i32
  }
  func.func @transform_9(%arg0: i32) -> (i32, i32) {
    %c0_i32 = arith.constant 0 : i32
    %c0_i32_0 = arith.constant 0 : i32
    return %arg0, %c0_i32 : i32, i32
  }
  func.func @transform_10(%arg0: i32) -> (i32, i32) {
    %c0_i32 = arith.constant 0 : i32
    %c0_i32_0 = arith.constant 0 : i32
    return %arg0, %c0_i32 : i32, i32
  }
}

</mosaic_0001>

<llo_original>
// kernel: tpu_custom_call.1
$region0: #{tpu_custom_call.1}
  #allocation0 [shape = 'u32[]', space=smem, size = 0x4, offset = 0x4, fixed_abs, tag = 'smem constant byte address 0x4 - core index']
  #allocation1 [shape = 'u32[144,128]{1,0:T(1,128)}', space=vmem, size = 0x12000, scoped, tag = 'internal scratch']
  %s0 = inlined_call_operand.hbm [shape: bf16[2,16,128], index: 0, kind: input, shape index: {}]
  %s1 = inlined_call_operand.hbm [shape: bf16[128,128], index: 1, kind: input, shape index: {}]
  %s2 = inlined_call_operand.vmem [shape: f32[1,128], index: 2, kind: input, shape index: {}]
  %s3 = inlined_call_operand.hbm [shape: bf16[128,128], index: 3, kind: input, shape index: {}]
  %s4 = inlined_call_operand.vmem [shape: f32[1,128], index: 4, kind: input, shape index: {}]
  %s5 = inlined_call_operand.hbm [shape: bf16[256,512], index: 5, kind: input, shape index: {}]
  %s6 = inlined_call_operand.vmem [shape: f32[1,512], index: 6, kind: input, shape index: {}]
  %s7 = inlined_call_operand.hbm [shape: bf16[512,128], index: 7, kind: input, shape index: {}]
  %s8 = inlined_call_operand.vmem [shape: f32[1,128], index: 8, kind: input, shape index: {}]
  %s9 = inlined_call_operand.hbm [shape: f32[16,128], index: 9, kind: output, shape index: {0}]
  %s10 = inlined_call_operand.hbm [shape: f32[16,128], index: 10, kind: output, shape index: {1}]
  %11 = xla_tuple %s9, %s10
  %s12 = sld [smem:[#allocation0]]
  $region74: #{tpu_custom_call.1} parent=0
    _
  %s14 = ssub.s32 1, %s12
  %s15 = scalar_select 0, %s14, %s12
  $region1: #{tpu_custom_call.1} parent=0
    #allocation2 [shape = 'u8[8192]{0}', space=vmem, size = 0x2000, scoped, tag = 'input window, operand 0, single buffered']
    #allocation3 [shape = 's32[1]{0}', space=sflag, size = 0x4, scoped, tag = 'scoped memory for tpu_custom_call.1']
    #allocation4 [shape = 's32[1]{0}', space=sflag, size = 0x4, scoped, tag = 'scoped memory for tpu_custom_call.1']
    #allocation5 [shape = 'u8[32768]{0}', space=vmem, size = 0x8000, scoped, tag = 'input window, operand 1, single buffered']
    #allocation6 [shape = 's32[1]{0}', space=sflag, size = 0x4, scoped, tag = 'scoped memory for tpu_custom_call.1']
    #allocation7 [shape = 'u8[32768]{0}', space=vmem, size = 0x8000, scoped, tag = 'input window, operand 3, single buffered']
    #allocation8 [shape = 'u8[262144]{0}', space=vmem, size = 0x40000, scoped, tag = 'input window, operand 5, single buffered']
    #allocation9 [shape = 's32[1]{0}', space=sflag, size = 0x4, scoped, tag = 'scoped memory for tpu_custom_call.1']
    #allocation10 [shape = 'u8[131072]{0}', space=vmem, size = 0x20000, scoped, tag = 'input window, operand 7, single buffered']
    #allocation11 [shape = 'u8[8192]{0}', space=vmem, size = 0x2000, scoped, tag = 'output window, operand 0, single buffered']
    #allocation12 [shape = 'u8[8192]{0}', space=vmem, size = 0x2000, scoped, tag = 'output window, operand 1, single buffered']
    #allocation13 [shape = 's32[1]{0}', space=sflag, size = 0x4, scoped, tag = 'scoped memory for tpu_custom_call.1']
    %16 = vsyncpa [#allocation3], 0
    %17 = vsyncpa [#allocation6], 0
    %18 = vsyncpa [#allocation9], 0
    %19 = vsyncpa [#allocation4], 0
    %20 = vsyncpa [#allocation13], 0
    // Predicated region
    $region2: #{tpu_custom_call.1} parent=1 // pred_check
      _
    $region3: #{tpu_custom_call.1} parent=1 // pred_check_branch
      %22 = sbr.rel (0) target = $region5
    $region4: #{tpu_custom_call.1} parent=1 // pred_region
      %s24 = ssub.s32 256, 256
      %25 = vsyncadd [#allocation3], %s24
      %s26 = sshll.u32 [#allocation2], 4
      %s27 = int_to_ptr.vmem [resolvable:$true] %s26
      %32 = dma.hbm_to_vmem [thread:$0]  %s0, 256, %s27, [#allocation3], 64, 64, 4
    $region5: #{tpu_custom_call.1} parent=1 // pred_fallthru
      _
    // Predicated region
    $region6: #{tpu_custom_call.1} parent=1 // pred_check
      _
    $region7: #{tpu_custom_call.1} parent=1 // pred_check_branch
      %34 = sbr.rel (0) target = $region9
    $region8: #{tpu_custom_call.1} parent=1 // pred_region
      %s36 = ssub.s32 1024, 1024
      %37 = vsyncadd [#allocation6], %s36
      %s38 = sshll.u32 [#allocation5], 4
      %s39 = int_to_ptr.vmem [resolvable:$true] %s38
      %44 = dma.hbm_to_vmem [thread:$0]  %s1, 1024, %s39, [#allocation6], 64, 64, 4
    $region9: #{tpu_custom_call.1} parent=1 // pred_fallthru
      _
    // Predicated region
    $region10: #{tpu_custom_call.1} parent=1 // pred_check
      _
    $region11: #{tpu_custom_call.1} parent=1 // pred_check_branch
      %46 = sbr.rel (0) target = $region13
    $region12: #{tpu_custom_call.1} parent=1 // pred_region
      _
    $region13: #{tpu_custom_call.1} parent=1 // pred_fallthru
      _
    // Predicated region
    $region14: #{tpu_custom_call.1} parent=1 // pred_check
      _
    $region15: #{tpu_custom_call.1} parent=1 // pred_check_branch
      %48 = sbr.rel (0) target = $region17
    $region16: #{tpu_custom_call.1} parent=1 // pred_region
      %s50 = ssub.s32 1024, 1024
      %51 = vsyncadd [#allocation6], %s50
      %s52 = sshll.u32 [#allocation7], 4
      %s53 = int_to_ptr.vmem [resolvable:$true] %s52
      %58 = dma.hbm_to_vmem [thread:$0]  %s3, 1024, %s53, [#allocation6], 64, 64, 4
    $region17: #{tpu_custom_call.1} parent=1 // pred_fallthru
      _
    // Predicated region
    $region18: #{tpu_custom_call.1} parent=1 // pred_check
      _
    $region19: #{tpu_custom_call.1} parent=1 // pred_check_branch
      %60 = sbr.rel (0) target = $region21
    $region20: #{tpu_custom_call.1} parent=1 // pred_region
      _
    $region21: #{tpu_custom_call.1} parent=1 // pred_fallthru
      _
    // Predicated region
    $region22: #{tpu_custom_call.1} parent=1 // pred_check
      _
    $region23: #{tpu_custom_call.1} parent=1 // pred_check_branch
      %62 = sbr.rel (0) target = $region25
    $region24: #{tpu_custom_call.1} parent=1 // pred_region
      %s64 = ssub.s32 8192, 8192
      %65 = vsyncadd [#allocation9], %s64
      %s66 = sshll.u32 [#allocation8], 4
      %s67 = int_to_ptr.vmem [resolvable:$true] %s66
      %72 = dma.hbm_to_vmem [thread:$0]  %s5, 8192, %s67, [#allocation9], 256, 256, 16
    $region25: #{tpu_custom_call.1} parent=1 // pred_fallthru
      _
    // Predicated region
    $region26: #{tpu_custom_call.1} parent=1 // pred_check
      _
    $region27: #{tpu_custom_call.1} parent=1 // pred_check_branch
      %74 = sbr.rel (0) target = $region29
    $region28: #{tpu_custom_call.1} parent=1 // pred_region
      _
    $region29: #{tpu_custom_call.1} parent=1 // pred_fallthru
      _
    // Predicated region
    $region30: #{tpu_custom_call.1} parent=1 // pred_check
      _
    $region31: #{tpu_custom_call.1} parent=1 // pred_check_branch
      %76 = sbr.rel (0) target = $region33
    $region32: #{tpu_custom_call.1} parent=1 // pred_region
      %s78 = ssub.s32 4096, 4096
      %79 = vsyncadd [#allocation9], %s78
      %s80 = sshll.u32 [#allocation10], 4
      %s81 = int_to_ptr.vmem [resolvable:$true] %s80
      %86 = dma.hbm_to_vmem [thread:$0]  %s7, 4096, %s81, [#allocation9], 64, 64, 4
    $region33: #{tpu_custom_call.1} parent=1 // pred_fallthru
      _
    // Predicated region
    $region34: #{tpu_custom_call.1} parent=1 // pred_check
      _
    $region35: #{tpu_custom_call.1} parent=1 // pred_check_branch
      %88 = sbr.rel (0) target = $region37
    $region36: #{tpu_custom_call.1} parent=1 // pred_region
      _
    $region37: #{tpu_custom_call.1} parent=1 // pred_fallthru
      _
    // Predicated region
    $region38: #{tpu_custom_call.1} parent=1 // pred_check
      _
    $region39: #{tpu_custom_call.1} parent=1 // pred_check_branch
      %90 = sbr.rel (0) target = $region41
    $region40: #{tpu_custom_call.1} parent=1 // pred_region
      %91 = dma.done [#allocation3], 256
    $region41: #{tpu_custom_call.1} parent=1 // pred_fallthru
      _
    // Predicated region
    $region42: #{tpu_custom_call.1} parent=1 // pred_check
      _
    $region43: #{tpu_custom_call.1} parent=1 // pred_check_branch
      %93 = sbr.rel (0) target = $region45
    $region44: #{tpu_custom_call.1} parent=1 // pred_region
      %94 = dma.done [#allocation6], 1024
    $region45: #{tpu_custom_call.1} parent=1 // pred_fallthru
      _
    // Predicated region
    $region46: #{tpu_custom_call.1} parent=1 // pred_check
      _
    $region47: #{tpu_custom_call.1} parent=1 // pred_check_branch
      %96 = sbr.rel (0) target = $region49
    $region48: #{tpu_custom_call.1} parent=1 // pred_region
      %97 = dma.done [#allocation6], 1024
    $region49: #{tpu_custom_call.1} parent=1 // pred_fallthru
      _
    // Predicated region
    $region50: #{tpu_custom_call.1} parent=1 // pred_check
      _
    $region51: #{tpu_custom_call.1} parent=1 // pred_check_branch
      %99 = sbr.rel (0) target = $region53
    $region52: #{tpu_custom_call.1} parent=1 // pred_region
      %100 = dma.done [#allocation9], 8192
    $region53: #{tpu_custom_call.1} parent=1 // pred_fallthru
      _
    // Predicated region
    $region54: #{tpu_custom_call.1} parent=1 // pred_check
      _
    $region55: #{tpu_custom_call.1} parent=1 // pred_check_branch
      %102 = sbr.rel (0) target = $region57
    $region56: #{tpu_custom_call.1} parent=1 // pred_region
      %103 = dma.done [#allocation9], 4096
    $region57: #{tpu_custom_call.1} parent=1 // pred_fallthru
      _
    %v105 = vld [vmem:[#allocation2] sm:$0xf]
    %v106 = vld [vmem:[#allocation2 + $0x4] sm:$0xf]
    %v107 = vld [vmem:[#allocation2 + $0x8] sm:$0xf]
    %v108 = vld [vmem:[#allocation2 + $0xc] sm:$0xf]
    %v109 = vld [vmem:[#allocation5] sm:$0xf]
    %v110 = vld [vmem:[#allocation5 + $0x4] sm:$0xf]
    %v111 = vld [vmem:[#allocation5 + $0x8] sm:$0xf]
    %v112 = vld [vmem:[#allocation5 + $0xc] sm:$0xf]
    %v113 = vld [vmem:[#allocation5 + $0x10] sm:$0xf]
    %v114 = vld [vmem:[#allocation5 + $0x14] sm:$0xf]
    %v115 = vld [vmem:[#allocation5 + $0x18] sm:$0xf]
    %v116 = vld [vmem:[#allocation5 + $0x1c] sm:$0xf]
    %v117 = vld [vmem:[#allocation5 + $0x20] sm:$0xf]
    %v118 = vld [vmem:[#allocation5 + $0x24] sm:$0xf]
    %v119 = vld [vmem:[#allocation5 + $0x28] sm:$0xf]
    %v120 = vld [vmem:[#allocation5 + $0x2c] sm:$0xf]
    %v121 = vld [vmem:[#allocation5 + $0x30] sm:$0xf]
    %v122 = vld [vmem:[#allocation5 + $0x34] sm:$0xf]
    %v123 = vld [vmem:[#allocation5 + $0x38] sm:$0xf]
    %v124 = vld [vmem:[#allocation5 + $0x3c] sm:$0xf]
    %v125 = vld [vmem:[%s2] sm:$0x1]
    %v127 = vlaneseq
    %v128 = vshrl.u32 %v127, 7
    %v129 = vsub.s32 0, %v128
    %v130 = vrot.slane %v125, %v129
    %v136 = vunpack.c.l.b16 %v105
    %v137 = vunpack.c.l.b16 %v106
    %v138 = vunpack.c.l.b16 %v107
    %v139 = vunpack.c.l.b16 %v108
    %v140 = vpack.c.b16 %v137, %v136
    %v141 = vpack.c.b16 %v139, %v138
    %v160 = vunpack.c.l.b16 %v109
    %v161 = vunpack.c.l.b16 %v110
    %v162 = vunpack.c.l.b16 %v111
    %v163 = vunpack.c.l.b16 %v112
    %v164 = vunpack.c.l.b16 %v113
    %v165 = vunpack.c.l.b16 %v114
    %v166 = vunpack.c.l.b16 %v115
    %v167 = vunpack.c.l.b16 %v116
    %v168 = vunpack.c.l.b16 %v117
    %v169 = vunpack.c.l.b16 %v118
    %v170 = vunpack.c.l.b16 %v119
    %v171 = vunpack.c.l.b16 %v120
    %v172 = vunpack.c.l.b16 %v121
    %v173 = vunpack.c.l.b16 %v122
    %v174 = vunpack.c.l.b16 %v123
    %v175 = vunpack.c.l.b16 %v124
    %v176 = vpack.c.b16 %v161, %v160
    %v177 = vpack.c.b16 %v163, %v162
    %v178 = vpack.c.b16 %v165, %v164
    %v179 = vpack.c.b16 %v167, %v166
    %v180 = vpack.c.b16 %v169, %v168
    %v181 = vpack.c.b16 %v171, %v170
    %v182 = vpack.c.b16 %v173, %v172
    %v183 = vpack.c.b16 %v175, %v174
    %192 = vmatprep.subr.bf16.mxu0 0
    %193 = vmatpush1.bf16.msra.mxu0 %v183
    %194 = vmatprep.subr.bf16.mxu0 0
    %195 = vmatpush1.bf16.msra.mxu0 %v182
    %196 = vmatprep.subr.bf16.mxu0 0
    %197 = vmatpush1.bf16.msra.mxu0 %v181
    %198 = vmatprep.subr.bf16.mxu0 0
    %199 = vmatpush1.bf16.msra.mxu0 %v180
    %200 = vmatprep.subr.bf16.mxu0 0
    %201 = vmatpush1.bf16.msra.mxu0 %v179
    %202 = vmatprep.subr.bf16.mxu0 0
    %203 = vmatpush1.bf16.msra.mxu0 %v178
    %204 = vmatprep.subr.bf16.mxu0 0
    %205 = vmatpush1.bf16.msra.mxu0 %v177
    %206 = vmatprep.subr.bf16.mxu0 0
    %207 = vmatpush1.bf16.msra.mxu0 %v176
    %208 = vmatprep.subr.bf16.mxu0 0
    %209 = vmatpush2.bf16.msra.mxu0 0
    %210 = vmatprep.subr.bf16.mxu0 0
    %211 = vmatpush2.bf16.msra.mxu0 0
    %212 = vmatprep.subr.bf16.mxu0 0
    %213 = vmatpush2.bf16.msra.mxu0 0
    %214 = vmatprep.subr.bf16.mxu0 0
    %215 = vmatpush2.bf16.msra.mxu0 0
    %216 = vmatprep.subr.bf16.mxu0 0
    %217 = vmatpush2.bf16.msra.mxu0 0
    %218 = vmatprep.subr.bf16.mxu0 0
    %219 = vmatpush2.bf16.msra.mxu0 0
    %220 = vmatprep.subr.bf16.mxu0 0
    %221 = vmatpush2.bf16.msra.mxu0 0
    %222 = vmatprep.subr.bf16.mxu0 0
    %223 = vmatpush2.bf16.msra.mxu0 0
    %224 = vmatprep.mubr.bf16.mxu0 0
    %225 = vmatmul.mubr.bf16.gmra.mxu0 %v140
    %v226 = vpop.f32.mrf.mxu0
    %v227 = vadd.f32 %v130, %v226
    %v228 = vpop.f32.mrf.mxu0
    %v229 = vpop.f32.mrf.mxu0
    %v230 = vadd.f32 %v130, %v229
    %v231 = vpop.f32.mrf.mxu0
    %232 = vmatprep.mubr.bf16.mxu0 0
    %233 = vmatmul.mubr.bf16.gmra.mxu0 %v141
    %v234 = vpop.f32.mrf.mxu0
    %v235 = vadd.f32 %v130, %v234
    %v236 = vpop.f32.mrf.mxu0
    %v237 = vpop.f32.mrf.mxu0
    %v238 = vadd.f32 %v130, %v237
    %v239 = vpop.f32.mrf.mxu0
    %240 = vdwg.mxu0
    %v241 = vmax.f32 %v227, 0.0
    %v242 = vmax.f32 %v230, 0.0
    %v243 = vmax.f32 %v235, 0.0
    %v244 = vmax.f32 %v238, 0.0
    %v245 = vpack.c.bf16 %v242, %v241
    %v246 = vpack.c.bf16 %v244, %v243
    %v247 = vld [vmem:[#allocation7] sm:$0xf]
    %v248 = vld [vmem:[#allocation7 + $0x4] sm:$0xf]
    %v249 = vld [vmem:[#allocation7 + $0x8] sm:$0xf]
    %v250 = vld [vmem:[#allocation7 + $0xc] sm:$0xf]
    %v251 = vld [vmem:[#allocation7 + $0x10] sm:$0xf]
    %v252 = vld [vmem:[#allocation7 + $0x14] sm:$0xf]
    %v253 = vld [vmem:[#allocation7 + $0x18] sm:$0xf]
    %v254 = vld [vmem:[#allocation7 + $0x1c] sm:$0xf]
    %v255 = vld [vmem:[#allocation7 + $0x20] sm:$0xf]
    %v256 = vld [vmem:[#allocation7 + $0x24] sm:$0xf]
    %v257 = vld [vmem:[#allocation7 + $0x28] sm:$0xf]
    %v258 = vld [vmem:[#allocation7 + $0x2c] sm:$0xf]
    %v259 = vld [vmem:[#allocation7 + $0x30] sm:$0xf]
    %v260 = vld [vmem:[#allocation7 + $0x34] sm:$0xf]
    %v261 = vld [vmem:[#allocation7 + $0x38] sm:$0xf]
    %v262 = vld [vmem:[#allocation7 + $0x3c] sm:$0xf]
    %v263 = vld [vmem:[%s4] sm:$0x1]
    %v265 = vlaneseq
    %v266 = vshrl.u32 %v265, 7
    %v267 = vsub.s32 0, %v266
    %v268 = vrot.slane %v263, %v267
    %v286 = vunpack.c.l.b16 %v247
    %v287 = vunpack.c.l.b16 %v248
    %v288 = vunpack.c.l.b16 %v249
    %v289 = vunpack.c.l.b16 %v250
    %v290 = vunpack.c.l.b16 %v251
    %v291 = vunpack.c.l.b16 %v252
    %v292 = vunpack.c.l.b16 %v253
    %v293 = vunpack.c.l.b16 %v254
    %v294 = vunpack.c.l.b16 %v255
    %v295 = vunpack.c.l.b16 %v256
    %v296 = vunpack.c.l.b16 %v257
    %v297 = vunpack.c.l.b16 %v258
    %v298 = vunpack.c.l.b16 %v259
    %v299 = vunpack.c.l.b16 %v260
    %v300 = vunpack.c.l.b16 %v261
    %v301 = vunpack.c.l.b16 %v262
    %v302 = vpack.c.b16 %v287, %v286
    %v303 = vpack.c.b16 %v289, %v288
    %v304 = vpack.c.b16 %v291, %v290
    %v305 = vpack.c.b16 %v293, %v292
    %v306 = vpack.c.b16 %v295, %v294
    %v307 = vpack.c.b16 %v297, %v296
    %v308 = vpack.c.b16 %v299, %v298
    %v309 = vpack.c.b16 %v301, %v300
    %318 = vmatprep.subr.bf16.mxu0 0
    %319 = vmatpush1.bf16.msra.mxu0 %v309
    %320 = vmatprep.subr.bf16.mxu0 0
    %321 = vmatpush1.bf16.msra.mxu0 %v308
    %322 = vmatprep.subr.bf16.mxu0 0
    %323 = vmatpush1.bf16.msra.mxu0 %v307
    %324 = vmatprep.subr.bf16.mxu0 0
    %325 = vmatpush1.bf16.msra.mxu0 %v306
    %326 = vmatprep.subr.bf16.mxu0 0
    %327 = vmatpush1.bf16.msra.mxu0 %v305
    %328 = vmatprep.subr.bf16.mxu0 0
    %329 = vmatpush1.bf16.msra.mxu0 %v304
    %330 = vmatprep.subr.bf16.mxu0 0
    %331 = vmatpush1.bf16.msra.mxu0 %v303
    %332 = vmatprep.subr.bf16.mxu0 0
    %333 = vmatpush1.bf16.msra.mxu0 %v302
    %334 = vmatprep.subr.bf16.mxu0 0
    %335 = vmatpush2.bf16.msra.mxu0 0
    %336 = vmatprep.subr.bf16.mxu0 0
    %337 = vmatpush2.bf16.msra.mxu0 0
    %338 = vmatprep.subr.bf16.mxu0 0
    %339 = vmatpush2.bf16.msra.mxu0 0
    %340 = vmatprep.subr.bf16.mxu0 0
    %341 = vmatpush2.bf16.msra.mxu0 0
    %342 = vmatprep.subr.bf16.mxu0 0
    %343 = vmatpush2.bf16.msra.mxu0 0
    %344 = vmatprep.subr.bf16.mxu0 0
    %345 = vmatpush2.bf16.msra.mxu0 0
    %346 = vmatprep.subr.bf16.mxu0 0
    %347 = vmatpush2.bf16.msra.mxu0 0
    %348 = vmatprep.subr.bf16.mxu0 0
    %349 = vmatpush2.bf16.msra.mxu0 0
    %350 = vmatprep.mubr.bf16.mxu0 0
    %351 = vmatmul.mubr.bf16.gmra.mxu0 %v245
    %v352 = vpop.f32.mrf.mxu0
    %v353 = vadd.f32 %v268, %v352
    %v354 = vpop.f32.mrf.mxu0
    %v355 = vpop.f32.mrf.mxu0
    %v356 = vadd.f32 %v268, %v355
    %v357 = vpop.f32.mrf.mxu0
    %358 = vmatprep.mubr.bf16.mxu0 0
    %359 = vmatmul.mubr.bf16.gmra.mxu0 %v246
    %v360 = vpop.f32.mrf.mxu0
    %v361 = vadd.f32 %v268, %v360
    %v362 = vpop.f32.mrf.mxu0
    %v363 = vpop.f32.mrf.mxu0
    %v364 = vadd.f32 %v268, %v363
    %v365 = vpop.f32.mrf.mxu0
    %366 = vdwg.mxu0
    %v367 = vmax.f32 %v353, 0.0
    %v368 = vmax.f32 %v356, 0.0
    %v369 = vmax.f32 %v361, 0.0
    %v370 = vmax.f32 %v364, 0.0
    %v371 = vpack.c.bf16 %v368, %v367
    %v372 = vpack.c.bf16 %v370, %v369
    %v373 = vld [vmem:[#allocation8] sm:$0xff]
    %v374 = vld [vmem:[#allocation8 + $0x8] sm:$0xff]
    %v375 = vld [vmem:[#allocation8 + $0x10] sm:$0xff]
    %v376 = vld [vmem:[#allocation8 + $0x18] sm:$0xff]
    %v377 = vld [vmem:[#allocation8 + $0x20] sm:$0xff]
    %v378 = vld [vmem:[#allocation8 + $0x28] sm:$0xff]
    %v379 = vld [vmem:[#allocation8 + $0x30] sm:$0xff]
    %v380 = vld [vmem:[#allocation8 + $0x38] sm:$0xff]
    %v381 = vld [vmem:[#allocation8 + $0x40] sm:$0xff]
    %v382 = vld [vmem:[#allocation8 + $0x48] sm:$0xff]
    %v383 = vld [vmem:[#allocation8 + $0x50] sm:$0xff]
    %v384 = vld [vmem:[#allocation8 + $0x58] sm:$0xff]
    %v385 = vld [vmem:[#allocation8 + $0x60] sm:$0xff]
    %v386 = vld [vmem:[#allocation8 + $0x68] sm:$0xff]
    %v387 = vld [vmem:[#allocation8 + $0x70] sm:$0xff]
    %v388 = vld [vmem:[#allocation8 + $0x78] sm:$0xff]
    %v389 = vld [vmem:[#allocation8 + $0x80] sm:$0xff]
    %v390 = vld [vmem:[#allocation8 + $0x88] sm:$0xff]
    %v391 = vld [vmem:[#allocation8 + $0x90] sm:$0xff]
    %v392 = vld [vmem:[#allocation8 + $0x98] sm:$0xff]
    %v393 = vld [vmem:[#allocation8 + $0xa0] sm:$0xff]
    %v394 = vld [vmem:[#allocation8 + $0xa8] sm:$0xff]
    %v395 = vld [vmem:[#allocation8 + $0xb0] sm:$0xff]
    %v396 = vld [vmem:[#allocation8 + $0xb8] sm:$0xff]
    %v397 = vld [vmem:[#allocation8 + $0xc0] sm:$0xff]
    %v398 = vld [vmem:[#allocation8 + $0xc8] sm:$0xff]
    %v399 = vld [vmem:[#allocation8 + $0xd0] sm:$0xff]
    %v400 = vld [vmem:[#allocation8 + $0xd8] sm:$0xff]
    %v401 = vld [vmem:[#allocation8 + $0xe0] sm:$0xff]
    %v402 = vld [vmem:[#allocation8 + $0xe8] sm:$0xff]
    %v403 = vld [vmem:[#allocation8 + $0xf0] sm:$0xff]
    %v404 = vld [vmem:[#allocation8 + $0xf8] sm:$0xff]
    %v405 = vld [vmem:[#allocation8 + $0x100] sm:$0xff]
    %v406 = vld [vmem:[#allocation8 + $0x108] sm:$0xff]
    %v407 = vld [vmem:[#allocation8 + $0x110] sm:$0xff]
    %v408 = vld [vmem:[#allocation8 + $0x118] sm:$0xff]
    %v409 = vld [vmem:[#allocation8 + $0x120] sm:$0xff]
    %v410 = vld [vmem:[#allocation8 + $0x128] sm:$0xff]
    %v411 = vld [vmem:[#allocation8 + $0x130] sm:$0xff]
    %v412 = vld [vmem:[#allocation8 + $0x138] sm:$0xff]
    %v413 = vld [vmem:[#allocation8 + $0x140] sm:$0xff]
    %v414 = vld [vmem:[#allocation8 + $0x148] sm:$0xff]
    %v415 = vld [vmem:[#allocation8 + $0x150] sm:$0xff]
    %v416 = vld [vmem:[#allocation8 + $0x158] sm:$0xff]
    %v417 = vld [vmem:[#allocation8 + $0x160] sm:$0xff]
    %v418 = vld [vmem:[#allocation8 + $0x168] sm:$0xff]
    %v419 = vld [vmem:[#allocation8 + $0x170] sm:$0xff]
    %v420 = vld [vmem:[#allocation8 + $0x178] sm:$0xff]
    %v421 = vld [vmem:[#allocation8 + $0x180] sm:$0xff]
    %v422 = vld [vmem:[#allocation8 + $0x188] sm:$0xff]
    %v423 = vld [vmem:[#allocation8 + $0x190] sm:$0xff]
    %v424 = vld [vmem:[#allocation8 + $0x198] sm:$0xff]
    %v425 = vld [vmem:[#allocation8 + $0x1a0] sm:$0xff]
    %v426 = vld [vmem:[#allocation8 + $0x1a8] sm:$0xff]
    %v427 = vld [vmem:[#allocation8 + $0x1b0] sm:$0xff]
    %v428 = vld [vmem:[#allocation8 + $0x1b8] sm:$0xff]
    %v429 = vld [vmem:[#allocation8 + $0x1c0] sm:$0xff]
    %v430 = vld [vmem:[#allocation8 + $0x1c8] sm:$0xff]
    %v431 = vld [vmem:[#allocation8 + $0x1d0] sm:$0xff]
    %v432 = vld [vmem:[#allocation8 + $0x1d8] sm:$0xff]
    %v433 = vld [vmem:[#allocation8 + $0x1e0] sm:$0xff]
    %v434 = vld [vmem:[#allocation8 + $0x1e8] sm:$0xff]
    %v435 = vld [vmem:[#allocation8 + $0x1f0] sm:$0xff]
    %v436 = vld [vmem:[#allocation8 + $0x1f8] sm:$0xff]
    %v437 = vld [vmem:[%s6] sm:$0xf]
    %v439 = vlaneseq
    %v440 = vshrl.u32 %v439, 7
    %v441 = vsub.s32 0, %v440
    %v442 = vrot.slane %v437, %v441
    %v443 = vlaneseq
    %v444 = vshrl.u32 %v443, 7
    %v445 = vsub.s32 1, %v444
    %v446 = vrot.slane %v437, %v445
    %v447 = vlaneseq
    %v448 = vshrl.u32 %v447, 7
    %v449 = vsub.s32 2, %v448
    %v450 = vrot.slane %v437, %v449
    %v451 = vlaneseq
    %v452 = vshrl.u32 %v451, 7
    %v453 = vsub.s32 3, %v452
    %v454 = vrot.slane %v437, %v453
    %v523 = vunpack.c.l.b16 %v373
    %v524 = vunpack.c.h.b16 %v373
    %v525 = vunpack.c.l.b16 %v374
    %v526 = vunpack.c.h.b16 %v374
    %v527 = vunpack.c.l.b16 %v375
    %v528 = vunpack.c.h.b16 %v375
    %v529 = vunpack.c.l.b16 %v376
    %v530 = vunpack.c.h.b16 %v376
    %v531 = vunpack.c.l.b16 %v377
    %v532 = vunpack.c.h.b16 %v377
    %v533 = vunpack.c.l.b16 %v378
    %v534 = vunpack.c.h.b16 %v378
    %v535 = vunpack.c.l.b16 %v379
    %v536 = vunpack.c.h.b16 %v379
    %v537 = vunpack.c.l.b16 %v380
    %v538 = vunpack.c.h.b16 %v380
    %v539 = vunpack.c.l.b16 %v381
    %v540 = vunpack.c.h.b16 %v381
    %v541 = vunpack.c.l.b16 %v382
    %v542 = vunpack.c.h.b16 %v382
    %v543 = vunpack.c.l.b16 %v383
    %v544 = vunpack.c.h.b16 %v383
    %v545 = vunpack.c.l.b16 %v384
    %v546 = vunpack.c.h.b16 %v384
    %v547 = vunpack.c.l.b16 %v385
    %v548 = vunpack.c.h.b16 %v385
    %v549 = vunpack.c.l.b16 %v386
    %v550 = vunpack.c.h.b16 %v386
    %v551 = vunpack.c.l.b16 %v387
    %v552 = vunpack.c.h.b16 %v387
    %v553 = vunpack.c.l.b16 %v388
    %v554 = vunpack.c.h.b16 %v388
    %v555 = vunpack.c.l.b16 %v389
    %v556 = vunpack.c.h.b16 %v389
    %v557 = vunpack.c.l.b16 %v390
    %v558 = vunpack.c.h.b16 %v390
    %v559 = vunpack.c.l.b16 %v391
    %v560 = vunpack.c.h.b16 %v391
    %v561 = vunpack.c.l.b16 %v392
    %v562 = vunpack.c.h.b16 %v392
    %v563 = vunpack.c.l.b16 %v393
    %v564 = vunpack.c.h.b16 %v393
    %v565 = vunpack.c.l.b16 %v394
    %v566 = vunpack.c.h.b16 %v394
    %v567 = vunpack.c.l.b16 %v395
    %v568 = vunpack.c.h.b16 %v395
    %v569 = vunpack.c.l.b16 %v396
    %v570 = vunpack.c.h.b16 %v396
    %v571 = vunpack.c.l.b16 %v397
    %v572 = vunpack.c.h.b16 %v397
    %v573 = vunpack.c.l.b16 %v398
    %v574 = vunpack.c.h.b16 %v398
    %v575 = vunpack.c.l.b16 %v399
    %v576 = vunpack.c.h.b16 %v399
    %v577 = vunpack.c.l.b16 %v400
    %v578 = vunpack.c.h.b16 %v400
    %v579 = vunpack.c.l.b16 %v401
    %v580 = vunpack.c.h.b16 %v401
    %v581 = vunpack.c.l.b16 %v402
    %v582 = vunpack.c.h.b16 %v402
    %v583 = vunpack.c.l.b16 %v403
    %v584 = vunpack.c.h.b16 %v403
    %v585 = vunpack.c.l.b16 %v404
    %v586 = vunpack.c.h.b16 %v404
    %v587 = vunpack.c.l.b16 %v405
    %v588 = vunpack.c.h.b16 %v405
    %v589 = vunpack.c.l.b16 %v406
    %v590 = vunpack.c.h.b16 %v406
    %v591 = vunpack.c.l.b16 %v407
    %v592 = vunpack.c.h.b16 %v407
    %v593 = vunpack.c.l.b16 %v408
    %v594 = vunpack.c.h.b16 %v408
    %v595 = vunpack.c.l.b16 %v409
    %v596 = vunpack.c.h.b16 %v409
    %v597 = vunpack.c.l.b16 %v410
    %v598 = vunpack.c.h.b16 %v410
    %v599 = vunpack.c.l.b16 %v411
    %v600 = vunpack.c.h.b16 %v411
    %v601 = vunpack.c.l.b16 %v412
    %v602 = vunpack.c.h.b16 %v412
    %v603 = vunpack.c.l.b16 %v413
    %v604 = vunpack.c.h.b16 %v413
    %v605 = vunpack.c.l.b16 %v414
    %v606 = vunpack.c.h.b16 %v414
    %v607 = vunpack.c.l.b16 %v415
    %v608 = vunpack.c.h.b16 %v415
    %v609 = vunpack.c.l.b16 %v416
    %v610 = vunpack.c.h.b16 %v416
    %v611 = vunpack.c.l.b16 %v417
    %v612 = vunpack.c.h.b16 %v417
    %v613 = vunpack.c.l.b16 %v418
    %v614 = vunpack.c.h.b16 %v418
    %v615 = vunpack.c.l.b16 %v419
    %v616 = vunpack.c.h.b16 %v419
    %v617 = vunpack.c.l.b16 %v420
    %v618 = vunpack.c.h.b16 %v420
    %v619 = vunpack.c.l.b16 %v421
    %v620 = vunpack.c.h.b16 %v421
    %v621 = vunpack.c.l.b16 %v422
    %v622 = vunpack.c.h.b16 %v422
    %v623 = vunpack.c.l.b16 %v423
    %v624 = vunpack.c.h.b16 %v423
    %v625 = vunpack.c.l.b16 %v424
    %v626 = vunpack.c.h.b16 %v424
    %v627 = vunpack.c.l.b16 %v425
    %v628 = vunpack.c.h.b16 %v425
    %v629 = vunpack.c.l.b16 %v426
    %v630 = vunpack.c.h.b16 %v426
    %v631 = vunpack.c.l.b16 %v427
    %v632 = vunpack.c.h.b16 %v427
    %v633 = vunpack.c.l.b16 %v428
    %v634 = vunpack.c.h.b16 %v428
    %v635 = vunpack.c.l.b16 %v429
    %v636 = vunpack.c.h.b16 %v429
    %v637 = vunpack.c.l.b16 %v430
    %v638 = vunpack.c.h.b16 %v430
    %v639 = vunpack.c.l.b16 %v431
    %v640 = vunpack.c.h.b16 %v431
    %v641 = vunpack.c.l.b16 %v432
    %v642 = vunpack.c.h.b16 %v432
    %v643 = vunpack.c.l.b16 %v433
    %v644 = vunpack.c.h.b16 %v433
    %v645 = vunpack.c.l.b16 %v434
    %v646 = vunpack.c.h.b16 %v434
    %v647 = vunpack.c.l.b16 %v435
    %v648 = vunpack.c.h.b16 %v435
    %v649 = vunpack.c.l.b16 %v436
    %v650 = vunpack.c.h.b16 %v436
    %v651 = vpack.c.b16 %v527, %v523
    %v652 = vpack.c.b16 %v528, %v524
    %v653 = vpack.c.b16 %v529, %v525
    %v654 = vpack.c.b16 %v530, %v526
    %v655 = vpack.c.b16 %v535, %v531
    %v656 = vpack.c.b16 %v536, %v532
    %v657 = vpack.c.b16 %v537, %v533
    %v658 = vpack.c.b16 %v538, %v534
    %v659 = vpack.c.b16 %v543, %v539
    %v660 = vpack.c.b16 %v544, %v540
    %v661 = vpack.c.b16 %v545, %v541
    %v662 = vpack.c.b16 %v546, %v542
    %v663 = vpack.c.b16 %v551, %v547
    %v664 = vpack.c.b16 %v552, %v548
    %v665 = vpack.c.b16 %v553, %v549
    %v666 = vpack.c.b16 %v554, %v550
    %v667 = vpack.c.b16 %v559, %v555
    %v668 = vpack.c.b16 %v560, %v556
    %v669 = vpack.c.b16 %v561, %v557
    %v670 = vpack.c.b16 %v562, %v558
    %v671 = vpack.c.b16 %v567, %v563
    %v672 = vpack.c.b16 %v568, %v564
    %v673 = vpack.c.b16 %v569, %v565
    %v674 = vpack.c.b16 %v570, %v566
    %v675 = vpack.c.b16 %v575, %v571
    %v676 = vpack.c.b16 %v576, %v572
    %v677 = vpack.c.b16 %v577, %v573
    %v678 = vpack.c.b16 %v578, %v574
    %v679 = vpack.c.b16 %v583, %v579
    %v680 = vpack.c.b16 %v584, %v580
    %v681 = vpack.c.b16 %v585, %v581
    %v682 = vpack.c.b16 %v586, %v582
    %v683 = vpack.c.b16 %v591, %v587
    %v684 = vpack.c.b16 %v592, %v588
    %v685 = vpack.c.b16 %v593, %v589
    %v686 = vpack.c.b16 %v594, %v590
    %v687 = vpack.c.b16 %v599, %v595
    %v688 = vpack.c.b16 %v600, %v596
    %v689 = vpack.c.b16 %v601, %v597
    %v690 = vpack.c.b16 %v602, %v598
    %v691 = vpack.c.b16 %v607, %v603
    %v692 = vpack.c.b16 %v608, %v604
    %v693 = vpack.c.b16 %v609, %v605
    %v694 = vpack.c.b16 %v610, %v606
    %v695 = vpack.c.b16 %v615, %v611
    %v696 = vpack.c.b16 %v616, %v612
    %v697 = vpack.c.b16 %v617, %v613
    %v698 = vpack.c.b16 %v618, %v614
    %v699 = vpack.c.b16 %v623, %v619
    %v700 = vpack.c.b16 %v624, %v620
    %v701 = vpack.c.b16 %v625, %v621
    %v702 = vpack.c.b16 %v626, %v622
    %v703 = vpack.c.b16 %v631, %v627
    %v704 = vpack.c.b16 %v632, %v628
    %v705 = vpack.c.b16 %v633, %v629
    %v706 = vpack.c.b16 %v634, %v630
    %v707 = vpack.c.b16 %v639, %v635
    %v708 = vpack.c.b16 %v640, %v636
    %v709 = vpack.c.b16 %v641, %v637
    %v710 = vpack.c.b16 %v642, %v638
    %v711 = vpack.c.b16 %v647, %v643
    %v712 = vpack.c.b16 %v648, %v644
    %v713 = vpack.c.b16 %v649, %v645
    %v714 = vpack.c.b16 %v650, %v646
    %779 = vmatprep.subr.bf16.mxu0 %v680
    %780 = vmatpush1.bf16.msra.mxu0 %v679
    %781 = vmatprep.subr.bf16.mxu0 %v676
    %782 = vmatpush1.bf16.msra.mxu0 %v675
    %783 = vmatprep.subr.bf16.mxu0 %v672
    %784 = vmatpush1.bf16.msra.mxu0 %v671
    %785 = vmatprep.subr.bf16.mxu0 %v668
    %786 = vmatpush1.bf16.msra.mxu0 %v667
    %787 = vmatprep.subr.bf16.mxu0 %v664
    %788 = vmatpush1.bf16.msra.mxu0 %v663
    %789 = vmatprep.subr.bf16.mxu0 %v660
    %790 = vmatpush1.bf16.msra.mxu0 %v659
    %791 = vmatprep.subr.bf16.mxu0 %v656
    %792 = vmatpush1.bf16.msra.mxu0 %v655
    %793 = vmatprep.subr.bf16.mxu0 %v652
    %794 = vmatpush1.bf16.msra.mxu0 %v651
    %795 = vmatprep.subr.bf16.mxu0 %v712
    %796 = vmatpush2.bf16.msra.mxu0 %v711
    %797 = vmatprep.subr.bf16.mxu0 %v708
    %798 = vmatpush2.bf16.msra.mxu0 %v707
    %799 = vmatprep.subr.bf16.mxu0 %v704
    %800 = vmatpush2.bf16.msra.mxu0 %v703
    %801 = vmatprep.subr.bf16.mxu0 %v700
    %802 = vmatpush2.bf16.msra.mxu0 %v699
    %803 = vmatprep.subr.bf16.mxu0 %v696
    %804 = vmatpush2.bf16.msra.mxu0 %v695
    %805 = vmatprep.subr.bf16.mxu0 %v692
    %806 = vmatpush2.bf16.msra.mxu0 %v691
    %807 = vmatprep.subr.bf16.mxu0 %v688
    %808 = vmatpush2.bf16.msra.mxu0 %v687
    %809 = vmatprep.subr.bf16.mxu0 %v684
    %810 = vmatpush2.bf16.msra.mxu0 %v683
    %811 = vmatprep.mubr.bf16.mxu0 %v372
    %812 = vmatmul.mubr.bf16.gmra.mxu0 %v371
    %v813 = vpop.f32.mrf.mxu0
    %v814 = vadd.f32 %v442, %v813
    %v815 = vpop.f32.mrf.mxu0
    %v816 = vadd.f32 %v446, %v815
    %v817 = vpop.f32.mrf.mxu0
    %v818 = vadd.f32 %v442, %v817
    %v819 = vpop.f32.mrf.mxu0
    %v820 = vadd.f32 %v446, %v819
    %821 = vdwg.mxu0
    %822 = vmatprep.subr.bf16.mxu0 %v682
    %823 = vmatpush1.bf16.msra.mxu0 %v681
    %824 = vmatprep.subr.bf16.mxu0 %v678
    %825 = vmatpush1.bf16.msra.mxu0 %v677
    %826 = vmatprep.subr.bf16.mxu0 %v674
    %827 = vmatpush1.bf16.msra.mxu0 %v673
    %828 = vmatprep.subr.bf16.mxu0 %v670
    %829 = vmatpush1.bf16.msra.mxu0 %v669
    %830 = vmatprep.subr.bf16.mxu0 %v666
    %831 = vmatpush1.bf16.msra.mxu0 %v665
    %832 = vmatprep.subr.bf16.mxu0 %v662
    %833 = vmatpush1.bf16.msra.mxu0 %v661
    %834 = vmatprep.subr.bf16.mxu0 %v658
    %835 = vmatpush1.bf16.msra.mxu0 %v657
    %836 = vmatprep.subr.bf16.mxu0 %v654
    %837 = vmatpush1.bf16.msra.mxu0 %v653
    %838 = vmatprep.subr.bf16.mxu0 %v714
    %839 = vmatpush2.bf16.msra.mxu0 %v713
    %840 = vmatprep.subr.bf16.mxu0 %v710
    %841 = vmatpush2.bf16.msra.mxu0 %v709
    %842 = vmatprep.subr.bf16.mxu0 %v706
    %843 = vmatpush2.bf16.msra.mxu0 %v705
    %844 = vmatprep.subr.bf16.mxu0 %v702
    %845 = vmatpush2.bf16.msra.mxu0 %v701
    %846 = vmatprep.subr.bf16.mxu0 %v698
    %847 = vmatpush2.bf16.msra.mxu0 %v697
    %848 = vmatprep.subr.bf16.mxu0 %v694
    %849 = vmatpush2.bf16.msra.mxu0 %v693
    %850 = vmatprep.subr.bf16.mxu0 %v690
    %851 = vmatpush2.bf16.msra.mxu0 %v689
    %852 = vmatprep.subr.bf16.mxu0 %v686
    %853 = vmatpush2.bf16.msra.mxu0 %v685
    %854 = vmatprep.mubr.bf16.mxu0 %v372
    %855 = vmatmul.mubr.bf16.gmra.mxu0 %v371
    %v856 = vpop.f32.mrf.mxu0
    %v857 = vadd.f32 %v450, %v856
    %v858 = vpop.f32.mrf.mxu0
    %v859 = vadd.f32 %v454, %v858
    %v860 = vpop.f32.mrf.mxu0
    %v861 = vadd.f32 %v450, %v860
    %v862 = vpop.f32.mrf.mxu0
    %v863 = vadd.f32 %v454, %v862
    %864 = vdwg.mxu0
    %v865 = vmax.f32 %v814, 0.0
    %v866 = vmax.f32 %v816, 0.0
    %v867 = vmax.f32 %v857, 0.0
    %v868 = vmax.f32 %v859, 0.0
    %v869 = vmax.f32 %v818, 0.0
    %v870 = vmax.f32 %v820, 0.0
    %v871 = vmax.f32 %v861, 0.0
    %v872 = vmax.f32 %v863, 0.0
    %v873 = vpack.c.bf16 %v869, %v865
    %v874 = vpack.c.bf16 %v870, %v866
    %v875 = vpack.c.bf16 %v871, %v867
    %v876 = vpack.c.bf16 %v872, %v868
    %v877 = vld [vmem:[#allocation10] sm:$0xf]
    %v878 = vld [vmem:[#allocation10 + $0x4] sm:$0xf]
    %v879 = vld [vmem:[#allocation10 + $0x8] sm:$0xf]
    %v880 = vld [vmem:[#allocation10 + $0xc] sm:$0xf]
    %v881 = vld [vmem:[#allocation10 + $0x10] sm:$0xf]
    %v882 = vld [vmem:[#allocation10 + $0x14] sm:$0xf]
    %v883 = vld [vmem:[#allocation10 + $0x18] sm:$0xf]
    %v884 = vld [vmem:[#allocation10 + $0x1c] sm:$0xf]
    %v885 = vld [vmem:[#allocation10 + $0x20] sm:$0xf]
    %v886 = vld [vmem:[#allocation10 + $0x24] sm:$0xf]
    %v887 = vld [vmem:[#allocation10 + $0x28] sm:$0xf]
    %v888 = vld [vmem:[#allocation10 + $0x2c] sm:$0xf]
    %v889 = vld [vmem:[#allocation10 + $0x30] sm:$0xf]
    %v890 = vld [vmem:[#allocation10 + $0x34] sm:$0xf]
    %v891 = vld [vmem:[#allocation10 + $0x38] sm:$0xf]
    %v892 = vld [vmem:[#allocation10 + $0x3c] sm:$0xf]
    %v893 = vld [vmem:[#allocation10 + $0x40] sm:$0xf]
    %v894 = vld [vmem:[#allocation10 + $0x44] sm:$0xf]
    %v895 = vld [vmem:[#allocation10 + $0x48] sm:$0xf]
    %v896 = vld [vmem:[#allocation10 + $0x4c] sm:$0xf]
    %v897 = vld [vmem:[#allocation10 + $0x50] sm:$0xf]
    %v898 = vld [vmem:[#allocation10 + $0x54] sm:$0xf]
    %v899 = vld [vmem:[#allocation10 + $0x58] sm:$0xf]
    %v900 = vld [vmem:[#allocation10 + $0x5c] sm:$0xf]
    %v901 = vld [vmem:[#allocation10 + $0x60] sm:$0xf]
    %v902 = vld [vmem:[#allocation10 + $0x64] sm:$0xf]
    %v903 = vld [vmem:[#allocation10 + $0x68] sm:$0xf]
    %v904 = vld [vmem:[#allocation10 + $0x6c] sm:$0xf]
    %v905 = vld [vmem:[#allocation10 + $0x70] sm:$0xf]
    %v906 = vld [vmem:[#allocation10 + $0x74] sm:$0xf]
    %v907 = vld [vmem:[#allocation10 + $0x78] sm:$0xf]
    %v908 = vld [vmem:[#allocation10 + $0x7c] sm:$0xf]
    %v909 = vld [vmem:[#allocation10 + $0x80] sm:$0xf]
    %v910 = vld [vmem:[#allocation10 + $0x84] sm:$0xf]
    %v911 = vld [vmem:[#allocation10 + $0x88] sm:$0xf]
    %v912 = vld [vmem:[#allocation10 + $0x8c] sm:$0xf]
    %v913 = vld [vmem:[#allocation10 + $0x90] sm:$0xf]
    %v914 = vld [vmem:[#allocation10 + $0x94] sm:$0xf]
    %v915 = vld [vmem:[#allocation10 + $0x98] sm:$0xf]
    %v916 = vld [vmem:[#allocation10 + $0x9c] sm:$0xf]
    %v917 = vld [vmem:[#allocation10 + $0xa0] sm:$0xf]
    %v918 = vld [vmem:[#allocation10 + $0xa4] sm:$0xf]
    %v919 = vld [vmem:[#allocation10 + $0xa8] sm:$0xf]
    %v920 = vld [vmem:[#allocation10 + $0xac] sm:$0xf]
    %v921 = vld [vmem:[#allocation10 + $0xb0] sm:$0xf]
    %v922 = vld [vmem:[#allocation10 + $0xb4] sm:$0xf]
    %v923 = vld [vmem:[#allocation10 + $0xb8] sm:$0xf]
    %v924 = vld [vmem:[#allocation10 + $0xbc] sm:$0xf]
    %v925 = vld [vmem:[#allocation10 + $0xc0] sm:$0xf]
    %v926 = vld [vmem:[#allocation10 + $0xc4] sm:$0xf]
    %v927 = vld [vmem:[#allocation10 + $0xc8] sm:$0xf]
    %v928 = vld [vmem:[#allocation10 + $0xcc] sm:$0xf]
    %v929 = vld [vmem:[#allocation10 + $0xd0] sm:$0xf]
    %v930 = vld [vmem:[#allocation10 + $0xd4] sm:$0xf]
    %v931 = vld [vmem:[#allocation10 + $0xd8] sm:$0xf]
    %v932 = vld [vmem:[#allocation10 + $0xdc] sm:$0xf]
    %v933 = vld [vmem:[#allocation10 + $0xe0] sm:$0xf]
    %v934 = vld [vmem:[#allocation10 + $0xe4] sm:$0xf]
    %v935 = vld [vmem:[#allocation10 + $0xe8] sm:$0xf]
    %v936 = vld [vmem:[#allocation10 + $0xec] sm:$0xf]
    %v937 = vld [vmem:[#allocation10 + $0xf0] sm:$0xf]
    %v938 = vld [vmem:[#allocation10 + $0xf4] sm:$0xf]
    %v939 = vld [vmem:[#allocation10 + $0xf8] sm:$0xf]
    %v940 = vld [vmem:[#allocation10 + $0xfc] sm:$0xf]
    %v941 = vld [vmem:[%s8] sm:$0x1]
    %v943 = vlaneseq
    %v944 = vshrl.u32 %v943, 7
    %v945 = vsub.s32 0, %v944
    %v946 = vrot.slane %v941, %v945
    %v1012 = vunpack.c.l.b16 %v877
    %v1013 = vunpack.c.l.b16 %v878
    %v1014 = vunpack.c.l.b16 %v879
    %v1015 = vunpack.c.l.b16 %v880
    %v1016 = vunpack.c.l.b16 %v881
    %v1017 = vunpack.c.l.b16 %v882
    %v1018 = vunpack.c.l.b16 %v883
    %v1019 = vunpack.c.l.b16 %v884
    %v1020 = vunpack.c.l.b16 %v885
    %v1021 = vunpack.c.l.b16 %v886
    %v1022 = vunpack.c.l.b16 %v887
    %v1023 = vunpack.c.l.b16 %v888
    %v1024 = vunpack.c.l.b16 %v889
    %v1025 = vunpack.c.l.b16 %v890
    %v1026 = vunpack.c.l.b16 %v891
    %v1027 = vunpack.c.l.b16 %v892
    %v1028 = vunpack.c.l.b16 %v893
    %v1029 = vunpack.c.l.b16 %v894
    %v1030 = vunpack.c.l.b16 %v895
    %v1031 = vunpack.c.l.b16 %v896
    %v1032 = vunpack.c.l.b16 %v897
    %v1033 = vunpack.c.l.b16 %v898
    %v1034 = vunpack.c.l.b16 %v899
    %v1035 = vunpack.c.l.b16 %v900
    %v1036 = vunpack.c.l.b16 %v901
    %v1037 = vunpack.c.l.b16 %v902
    %v1038 = vunpack.c.l.b16 %v903
    %v1039 = vunpack.c.l.b16 %v904
    %v1040 = vunpack.c.l.b16 %v905
    %v1041 = vunpack.c.l.b16 %v906
    %v1042 = vunpack.c.l.b16 %v907
    %v1043 = vunpack.c.l.b16 %v908
    %v1044 = vunpack.c.l.b16 %v909
    %v1045 = vunpack.c.l.b16 %v910
    %v1046 = vunpack.c.l.b16 %v911
    %v1047 = vunpack.c.l.b16 %v912
    %v1048 = vunpack.c.l.b16 %v913
    %v1049 = vunpack.c.l.b16 %v914
    %v1050 = vunpack.c.l.b16 %v915
    %v1051 = vunpack.c.l.b16 %v916
    %v1052 = vunpack.c.l.b16 %v917
    %v1053 = vunpack.c.l.b16 %v918
    %v1054 = vunpack.c.l.b16 %v919
    %v1055 = vunpack.c.l.b16 %v920
    %v1056 = vunpack.c.l.b16 %v921
    %v1057 = vunpack.c.l.b16 %v922
    %v1058 = vunpack.c.l.b16 %v923
    %v1059 = vunpack.c.l.b16 %v924
    %v1060 = vunpack.c.l.b16 %v925
    %v1061 = vunpack.c.l.b16 %v926
    %v1062 = vunpack.c.l.b16 %v927
    %v1063 = vunpack.c.l.b16 %v928
    %v1064 = vunpack.c.l.b16 %v929
    %v1065 = vunpack.c.l.b16 %v930
    %v1066 = vunpack.c.l.b16 %v931
    %v1067 = vunpack.c.l.b16 %v932
    %v1068 = vunpack.c.l.b16 %v933
    %v1069 = vunpack.c.l.b16 %v934
    %v1070 = vunpack.c.l.b16 %v935
    %v1071 = vunpack.c.l.b16 %v936
    %v1072 = vunpack.c.l.b16 %v937
    %v1073 = vunpack.c.l.b16 %v938
    %v1074 = vunpack.c.l.b16 %v939
    %v1075 = vunpack.c.l.b16 %v940
    %v1076 = vpack.c.b16 %v1013, %v1012
    %v1077 = vpack.c.b16 %v1015, %v1014
    %v1078 = vpack.c.b16 %v1017, %v1016
    %v1079 = vpack.c.b16 %v1019, %v1018
    %v1080 = vpack.c.b16 %v1021, %v1020
    %v1081 = vpack.c.b16 %v1023, %v1022
    %v1082 = vpack.c.b16 %v1025, %v1024
    %v1083 = vpack.c.b16 %v1027, %v1026
    %v1084 = vpack.c.b16 %v1029, %v1028
    %v1085 = vpack.c.b16 %v1031, %v1030
    %v1086 = vpack.c.b16 %v1033, %v1032
    %v1087 = vpack.c.b16 %v1035, %v1034
    %v1088 = vpack.c.b16 %v1037, %v1036
    %v1089 = vpack.c.b16 %v1039, %v1038
    %v1090 = vpack.c.b16 %v1041, %v1040
    %v1091 = vpack.c.b16 %v1043, %v1042
    %v1092 = vpack.c.b16 %v1045, %v1044
    %v1093 = vpack.c.b16 %v1047, %v1046
    %v1094 = vpack.c.b16 %v1049, %v1048
    %v1095 = vpack.c.b16 %v1051, %v1050
    %v1096 = vpack.c.b16 %v1053, %v1052
    %v1097 = vpack.c.b16 %v1055, %v1054
    %v1098 = vpack.c.b16 %v1057, %v1056
    %v1099 = vpack.c.b16 %v1059, %v1058
    %v1100 = vpack.c.b16 %v1061, %v1060
    %v1101 = vpack.c.b16 %v1063, %v1062
    %v1102 = vpack.c.b16 %v1065, %v1064
    %v1103 = vpack.c.b16 %v1067, %v1066
    %v1104 = vpack.c.b16 %v1069, %v1068
    %v1105 = vpack.c.b16 %v1071, %v1070
    %v1106 = vpack.c.b16 %v1073, %v1072
    %v1107 = vpack.c.b16 %v1075, %v1074
    %1140 = vmatprep.subr.bf16.mxu0 0
    %1141 = vmatpush1.bf16.msra.mxu0 %v1083
    %1142 = vmatprep.subr.bf16.mxu0 0
    %1143 = vmatpush1.bf16.msra.mxu0 %v1082
    %1144 = vmatprep.subr.bf16.mxu0 0
    %1145 = vmatpush1.bf16.msra.mxu0 %v1081
    %1146 = vmatprep.subr.bf16.mxu0 0
    %1147 = vmatpush1.bf16.msra.mxu0 %v1080
    %1148 = vmatprep.subr.bf16.mxu0 0
    %1149 = vmatpush1.bf16.msra.mxu0 %v1079
    %1150 = vmatprep.subr.bf16.mxu0 0
    %1151 = vmatpush1.bf16.msra.mxu0 %v1078
    %1152 = vmatprep.subr.bf16.mxu0 0
    %1153 = vmatpush1.bf16.msra.mxu0 %v1077
    %1154 = vmatprep.subr.bf16.mxu0 0
    %1155 = vmatpush1.bf16.msra.mxu0 %v1076
    %1156 = vmatprep.subr.bf16.mxu0 0
    %1157 = vmatpush2.bf16.msra.mxu0 %v1091
    %1158 = vmatprep.subr.bf16.mxu0 0
    %1159 = vmatpush2.bf16.msra.mxu0 %v1090
    %1160 = vmatprep.subr.bf16.mxu0 0
    %1161 = vmatpush2.bf16.msra.mxu0 %v1089
    %1162 = vmatprep.subr.bf16.mxu0 0
    %1163 = vmatpush2.bf16.msra.mxu0 %v1088
    %1164 = vmatprep.subr.bf16.mxu0 0
    %1165 = vmatpush2.bf16.msra.mxu0 %v1087
    %1166 = vmatprep.subr.bf16.mxu0 0
    %1167 = vmatpush2.bf16.msra.mxu0 %v1086
    %1168 = vmatprep.subr.bf16.mxu0 0
    %1169 = vmatpush2.bf16.msra.mxu0 %v1085
    %1170 = vmatprep.subr.bf16.mxu0 0
    %1171 = vmatpush2.bf16.msra.mxu0 %v1084
    %1172 = vmatprep.mubr.bf16.mxu0 %v874
    %1173 = vmatmul.mubr.bf16.gmra.mxu0 %v873
    %v1174 = vpop.f32.mrf.mxu0
    %v1175 = vadd.f32 %v946, %v1174
    %v1176 = vpop.f32.mrf.mxu0
    %v1177 = vpop.f32.mrf.mxu0
    %v1178 = vadd.f32 %v946, %v1177
    %v1179 = vpop.f32.mrf.mxu0
    %1180 = vdwg.mxu0
    %1181 = vmatprep.subr.bf16.mxu0 0
    %1182 = vmatpush1.bf16.msra.mxu0 %v1099
    %1183 = vmatprep.subr.bf16.mxu0 0
    %1184 = vmatpush1.bf16.msra.mxu0 %v1098
    %1185 = vmatprep.subr.bf16.mxu0 0
    %1186 = vmatpush1.bf16.msra.mxu0 %v1097
    %1187 = vmatprep.subr.bf16.mxu0 0
    %1188 = vmatpush1.bf16.msra.mxu0 %v1096
    %1189 = vmatprep.subr.bf16.mxu0 0
    %1190 = vmatpush1.bf16.msra.mxu0 %v1095
    %1191 = vmatprep.subr.bf16.mxu0 0
    %1192 = vmatpush1.bf16.msra.mxu0 %v1094
    %1193 = vmatprep.subr.bf16.mxu0 0
    %1194 = vmatpush1.bf16.msra.mxu0 %v1093
    %1195 = vmatprep.subr.bf16.mxu0 0
    %1196 = vmatpush1.bf16.msra.mxu0 %v1092
    %1197 = vmatprep.subr.bf16.mxu0 0
    %1198 = vmatpush2.bf16.msra.mxu0 %v1107
    %1199 = vmatprep.subr.bf16.mxu0 0
    %1200 = vmatpush2.bf16.msra.mxu0 %v1106
    %1201 = vmatprep.subr.bf16.mxu0 0
    %1202 = vmatpush2.bf16.msra.mxu0 %v1105
    %1203 = vmatprep.subr.bf16.mxu0 0
    %1204 = vmatpush2.bf16.msra.mxu0 %v1104
    %1205 = vmatprep.subr.bf16.mxu0 0
    %1206 = vmatpush2.bf16.msra.mxu0 %v1103
    %1207 = vmatprep.subr.bf16.mxu0 0
    %1208 = vmatpush2.bf16.msra.mxu0 %v1102
    %1209 = vmatprep.subr.bf16.mxu0 0
    %1210 = vmatpush2.bf16.msra.mxu0 %v1101
    %1211 = vmatprep.subr.bf16.mxu0 0
    %1212 = vmatpush2.bf16.msra.mxu0 %v1100
    %1213 = vmatprep.mubr.bf16.mxu0 %v876
    %1214 = vmatmul.mubr.bf16.gmra.mxu0 %v875
    %v1215 = vpop.f32.mrf.mxu0
    %v1216 = vadd.f32 %v1175, %v1215
    %v1217 = vpop.f32.mrf.mxu0
    %v1218 = vpop.f32.mrf.mxu0
    %v1219 = vadd.f32 %v1178, %v1218
    %v1220 = vpop.f32.mrf.mxu0
    %1221 = vdwg.mxu0
    %1222 = vst [vmem:[#allocation11] sm:$0xff] %v1216
    %1223 = vst [vmem:[#allocation11 + $0x8] sm:$0xff] %v1219
    %v1224 = vlaneseq
    %v1225 = vand.u32 %v1224, 127
    %vm1226 = vcmp.lt.s32.totalorder %v1225, 8
    %v1227 = vsel %vm1226, 1, 0
    %v1228 = vcvt.s32.f32 %v1227
    %1229 = vmax.xlane.f32.xlu0 %v1216
    %v1230 = vpop.xlane.xlu0 %1229
    %1231 = vmax.xlane.f32.xlu0 %v1219
    %v1232 = vpop.xlane.xlu0 %1231
    %v1233 = vsub.f32 %v1216, %v1230
    %v1234 = vsub.f32 %v1219, %v1232
    %v1235 = vmul.f32 %v1233, 1.442695
    %v1236 = vpow.pop %v1235
    %v1237 = vmul.f32 %v1234, 1.442695
    %v1238 = vpow.pop %v1237
    %v1239 = vmul.f32 %v1236, %v1228
    %v1240 = vmul.f32 %v1238, %v1228
    %1241 = vadd.xlane.f32.xlu0 %v1239
    %v1242 = vpop.xlane.xlu0 %1241
    %1243 = vadd.xlane.f32.xlu0 %v1240
    %v1244 = vpop.xlane.xlu0 %1243
    %v1245 = vrcp.pop %v1242
    %v1246 = vrcp.pop %v1244
    %v1247 = vmul.f32 %v1242, %v1245
    %v1248 = vmul.f32 %v1244, %v1246
    %v1249 = vsub.f32 2.0, %v1247
    %v1250 = vsub.f32 2.0, %v1248
    %v1251 = vmul.f32 %v1245, %v1249
    %v1252 = vmul.f32 %v1246, %v1250
    %v1253 = vmul.f32 %v1239, %v1251
    %v1254 = vmul.f32 %v1240, %v1252
    %1255 = vst [vmem:[#allocation12] sm:$0xff] %v1253
    %1256 = vst [vmem:[#allocation12 + $0x8] sm:$0xff] %v1254
    // Predicated region
    $region58: #{tpu_custom_call.1} parent=1 // pred_check
      _
    $region59: #{tpu_custom_call.1} parent=1 // pred_check_branch
      %1258 = sbr.rel (0) target = $region61
    $region60: #{tpu_custom_call.1} parent=1 // pred_region
      %s1260 = ssub.s32 256, 256
      %1261 = vsyncadd [#allocation4], %s1260
      %s1262 = sshll.u32 [#allocation11], 4
      %s1263 = int_to_ptr.vmem [resolvable:$true] %s1262
      %1268 = dma.vmem_to_hbm [thread:$0]  %s1263, 256, %s9, [#allocation4], 128, 128, 8
    $region61: #{tpu_custom_call.1} parent=1 // pred_fallthru
      _
    // Predicated region
    $region62: #{tpu_custom_call.1} parent=1 // pred_check
      _
    $region63: #{tpu_custom_call.1} parent=1 // pred_check_branch
      %1270 = sbr.rel (0) target = $region65
    $region64: #{tpu_custom_call.1} parent=1 // pred_region
      %s1272 = ssub.s32 256, 256
      %1273 = vsyncadd [#allocation13], %s1272
      %s1274 = sshll.u32 [#allocation12], 4
      %s1275 = int_to_ptr.vmem [resolvable:$true] %s1274
      %1280 = dma.vmem_to_hbm [thread:$0]  %s1275, 256, %s10, [#allocation13], 128, 128, 8
    $region65: #{tpu_custom_call.1} parent=1 // pred_fallthru
      _
    // Predicated region
    $region66: #{tpu_custom_call.1} parent=1 // pred_check
      _
    $region67: #{tpu_custom_call.1} parent=1 // pred_check_branch
      %1282 = sbr.rel (0) target = $region69
    $region68: #{tpu_custom_call.1} parent=1 // pred_region
      %1283 = dma.done [#allocation4], 256
    $region69: #{tpu_custom_call.1} parent=1 // pred_fallthru
      _
    // Predicated region
    $region70: #{tpu_custom_call.1} parent=1 // pred_check
      _
    $region71: #{tpu_custom_call.1} parent=1 // pred_check_branch
      %1285 = sbr.rel (0) target = $region73
    $region72: #{tpu_custom_call.1} parent=1 // pred_region
      %1286 = dma.done [#allocation13], 256
    $region73: #{tpu_custom_call.1} parent=1 // pred_fallthru
      _
    %1287 = vsyncpa [#allocation3], 1
    %1288 = vsyncpa [#allocation6], 1
    %1289 = vsyncpa [#allocation9], 1
    %1290 = vsyncpa [#allocation4], 1
    %1291 = vsyncpa [#allocation13], 1

</llo_original>
